<compile_context>
chip_gen: v6e
topology: v6e:2x2x1
jax: 0.10.0
libtpu: 0.0.40
codegen_flags: <defaults>
</compile_context>

<pallas_src>
import jax
import jax.numpy as jnp
from jax import lax
from jax.experimental import pallas as pl
from jax.experimental.pallas import tpu as pltpu

LAYERS = [54, 25, 20, 15, 20, 25, 18]  # input 9*6 -> ... -> output 9*2


def _round_up(x, m):
    return ((x + m - 1) // m) * m


def _default_compute_dtype():
    """bf16 weights / MXU inputs on v6e & v7x; f32 on v5e (no bf16 VPU/EUP)."""
    try:
        kind = jax.devices()[0].device_kind.lower()
    except Exception:
        return jnp.float32
    if ("v6" in kind) or ("v7" in kind) or ("tpu7" in kind):
        return jnp.bfloat16
    return jnp.float32


def _mlp_kernel(x_ref, *refs):
    """refs = (w0, b0, w1, b1, ..., w5, b5, out_ref).

    x_ref:   (tile, 54)      input rows (caller dtype)
    w_i:     (out_i, in_i)   torch Linear layout, compute dtype (f32 or bf16)
    b_i:     (out_i, 1)      f32
    out_ref: (tile, 18)      f32, batch-major (stored directly)

    Activations are kept feature-major (features, tile): the batch occupies the
    128-wide lane axis, so tanh/sigmoid and bias adds run on lane-dense vregs.
    """
    out_ref = refs[-1]
    param_refs = refs[:-1]
    n_layers = len(param_refs) // 2
    cdtype = param_refs[0].dtype              # weights carry the compute dtype

    x = x_ref[...].astype(cdtype)                                    # (tile, 54)

    # Layer 0: contract x's last dim directly (no materialized transpose);
    # accumulate in f32 on the MXU.
    w0 = param_refs[0][...]                                           # (25, 54)
    b0 = param_refs[1][...]                                           # (25, 1) f32
    z = lax.dot_general(w0, x, dimension_numbers=(((1,), (1,)), ((), ())),
                        preferred_element_type=jnp.float32) + b0      # (25, tile)
    a = jnp.tanh(z)

    for i in range(1, n_layers):
        w = param_refs[2 * i][...]                                    # (out, in)
        b = param_refs[2 * i + 1][...]                                # (out, 1)
        z = jnp.dot(w, a.astype(cdtype),
                    preferred_element_type=jnp.float32) + b           # (out, tile)
        if i < n_layers - 1:
            a = jnp.tanh(z)
        else:
            # sigmoid(z) == 0.5 * (tanh(z / 2) + 1): single EUP op chain.
            a = 0.5 * (jnp.tanh(0.5 * z) + 1.0)

    # Tiny (18, tile) -> (tile, 18) transpose on the otherwise-idle XLU, then a
    # direct batch-major store (no separate XLA transpose pass / extra launch).
    out_ref[...] = a.T.astype(out_ref.dtype)


# Named index maps (avoid loop-captured lambdas).
def _row_block_index_map(i):
    return (i, 0)


def _param_index_map(i):
    # Grid-invariant block: parameters are DMA'd once and stay resident in VMEM.
    return (0, 0)


def _run_tiles(x, flat_params, *, n_rows, tile):
    """One pallas_call over the first `n_rows` rows of x (n_rows % tile == 0)."""
    d_in, d_out = LAYERS[0], LAYERS[-1]
    grid = n_rows // tile

    in_specs = [pl.BlockSpec((tile, d_in), _row_block_index_map)]
    for p in flat_params:
        in_specs.append(pl.BlockSpec(p.shape, _param_index_map))
    out_spec = pl.BlockSpec((tile, d_out), _row_block_index_map)

    per_sample_flops = 2 * sum(LAYERS[i] * LAYERS[i + 1] for i in range(len(LAYERS) - 1))
    per_sample_trans = sum(LAYERS[1:])        # tanh + sigmoid element count
    param_bytes = sum(int(p.size) * p.dtype.itemsize for p in flat_params)
    cost = pl.CostEstimate(
        flops=per_sample_flops * n_rows,
        transcendentals=per_sample_trans * n_rows,
        bytes_accessed=n_rows * (d_in * x.dtype.itemsize + d_out * 4) + param_bytes,
    )

    fn = pl.pallas_call(
        _mlp_kernel,
        out_shape=jax.ShapeDtypeStruct((n_rows, d_out), jnp.float32),
        grid_spec=pltpu.PrefetchScalarGridSpec(
            num_scalar_prefetch=0,
            grid=(grid,),
            in_specs=in_specs,
            out_specs=out_spec,
        ),
        compiler_params=pltpu.CompilerParams(
            dimension_semantics=("parallel",),
        ),
        cost_estimate=cost,
    )
    return fn(x, *flat_params)


def _choose_tile(batch, target_tile):
    """Lane-dense (multiple of 128) tile; >= 2 grid steps when the batch allows
    it (v7x megacore); never larger than the 128-padded batch."""
    b_ceil = _round_up(max(int(batch), 1), 128)
    target = _round_up(max(int(target_tile), 128), 128)
    half = _round_up((b_ceil + 1) // 2, 128)
    return max(128, min(target, half, b_ceil))


def mlp_forward(x, params, *, batch_tile=2048, compute_dtype=None):
    """x: (B, 54); params: list of (W (out,in), b (out,1)). Returns (B, 18) f32."""
    B, d_in = x.shape
    assert d_in == LAYERS[0]
    cdtype = compute_dtype if compute_dtype is not None else _default_compute_dtype()

    flat_params = []
    for w, b in params:
        flat_params.append(jnp.asarray(w, dtype=cdtype))        # MXU-native weights
        flat_params.append(jnp.asarray(b, dtype=jnp.float32))   # f32 bias / accum

    tile = _choose_tile(B, batch_tile)
    n_bulk = (B // tile) * tile
    rem = B - n_bulk

    outs = []
    if n_bulk:
        # Bulk rows consumed in place: no whole-input jnp.pad copy.
        outs.append(_run_tiles(x, flat_params, n_rows=n_bulk, tile=tile))
    if rem:
        rem_tile = _round_up(rem, 128)   # tiny one-step tile for the ragged tail
        x_rem = jnp.pad(x[n_bulk:], ((0, rem_tile - rem), (0, 0)))
        out_rem = _run_tiles(x_rem, flat_params, n_rows=rem_tile, tile=rem_tile)
        outs.append(out_rem[:rem])
    return outs[0] if len(outs) == 1 else jnp.concatenate(outs, axis=0)


def init_params(key, layers=LAYERS):
    """Xavier-normal weights (gain=1.0, torch (out,in) layout), zero biases."""
    params = []
    for i in range(len(layers) - 1):
        fan_in, fan_out = layers[i], layers[i + 1]
        key, sub = jax.random.split(key)
        std = (2.0 / (fan_in + fan_out)) ** 0.5
        w = std * jax.random.normal(sub, (fan_out, fan_in), dtype=jnp.float32)
        b = jnp.zeros((fan_out, 1), dtype=jnp.float32)
        params.append((w, b))
    return params


def mlp_reference(x, params):
    """Pure-JAX reference (torch semantics: z = x @ W^T + b)."""
    a = x
    for i, (w, b) in enumerate(params):
        z = a @ w.T + b[:, 0]
        a = jnp.tanh(z) if i < len(params) - 1 else jax.nn.sigmoid(z)
    return a


if __name__ == "__main__":
    key = jax.random.PRNGKey(0)
    key, xkey = jax.random.split(key)

    params = init_params(key)

    # Small primary test (module's flattened (N, 9*6) input); forced f32 path
    # for a tight, chip-independent check.
    batch = 16
    x = jax.random.normal(xkey, (batch, LAYERS[0]), dtype=jnp.float32)
    out = jax.block_until_ready(mlp_forward(x, params, compute_dtype=jnp.float32))
    ref = mlp_reference(x, params)
    assert out.shape == (batch, LAYERS[-1])
    assert jnp.allclose(out, ref, atol=1e-4, rtol=1e-4), "mismatch (small batch, f32)"

    # Non-divisible batch: exercises the bulk + ragged-tail path and the
    # auto-selected compute dtype (bf16 on v6e/v7x, f32 on v5e).
    key, xkey2 = jax.random.split(key)
    batch2 = 1000
    x2 = jax.random.normal(xkey2, (batch2, LAYERS[0]), dtype=jnp.float32)
    out2 = jax.block_until_ready(mlp_forward(x2, params, batch_tile=2048))
    ref2 = mlp_reference(x2, params)
    assert out2.shape == (batch2, LAYERS[-1])
    auto_dtype = _default_compute_dtype()
    tol = 1e-4 if auto_dtype == jnp.float32 else 5e-2
    assert jnp.allclose(out2, ref2, atol=tol, rtol=tol), "mismatch (ragged batch)"

    print("KERNEL_OK")
</pallas_src>

<mosaic_0001>
module attributes {stable_mosaic.version = 11 : i64} {
  func.func @_mlp_kernel(%arg0: i32, %arg1: memref<128x54xf32, #tpu.memory_space<vmem>>, %arg2: memref<25x54xf32, #tpu.memory_space<vmem>>, %arg3: memref<25x1xf32, #tpu.memory_space<vmem>>, %arg4: memref<20x25xf32, #tpu.memory_space<vmem>>, %arg5: memref<20x1xf32, #tpu.memory_space<vmem>>, %arg6: memref<15x20xf32, #tpu.memory_space<vmem>>, %arg7: memref<15x1xf32, #tpu.memory_space<vmem>>, %arg8: memref<20x15xf32, #tpu.memory_space<vmem>>, %arg9: memref<20x1xf32, #tpu.memory_space<vmem>>, %arg10: memref<25x20xf32, #tpu.memory_space<vmem>>, %arg11: memref<25x1xf32, #tpu.memory_space<vmem>>, %arg12: memref<18x25xf32, #tpu.memory_space<vmem>>, %arg13: memref<18x1xf32, #tpu.memory_space<vmem>>, %arg14: memref<128x18xf32, #tpu.memory_space<vmem>>) attributes {dimension_semantics = [#tpu.dimension_semantics<parallel>], iteration_bounds = array<i64: 1>, scalar_prefetch = 0 : i64, scratch_operands = 0 : i64, tpu.core_type = #tpu.core_type<tc>, window_params = [{transform_indices = @transform_0, window_bounds = array<i64: 128, 54>}, {pipeline_mode = #tpu.pipeline_mode<synchronous>, transform_indices = @transform_1, window_bounds = array<i64: 25, 54>}, {pipeline_mode = #tpu.pipeline_mode<synchronous>, transform_indices = @transform_2, window_bounds = array<i64: 25, 1>}, {pipeline_mode = #tpu.pipeline_mode<synchronous>, transform_indices = @transform_3, window_bounds = array<i64: 20, 25>}, {pipeline_mode = #tpu.pipeline_mode<synchronous>, transform_indices = @transform_4, window_bounds = array<i64: 20, 1>}, {pipeline_mode = #tpu.pipeline_mode<synchronous>, transform_indices = @transform_5, window_bounds = array<i64: 15, 20>}, {pipeline_mode = #tpu.pipeline_mode<synchronous>, transform_indices = @transform_6, window_bounds = array<i64: 15, 1>}, {pipeline_mode = #tpu.pipeline_mode<synchronous>, transform_indices = @transform_7, window_bounds = array<i64: 20, 15>}, {pipeline_mode = #tpu.pipeline_mode<synchronous>, transform_indices = @transform_8, window_bounds = array<i64: 20, 1>}, {pipeline_mode = #tpu.pipeline_mode<synchronous>, transform_indices = @transform_9, window_bounds = array<i64: 25, 20>}, {pipeline_mode = #tpu.pipeline_mode<synchronous>, transform_indices = @transform_10, window_bounds = array<i64: 25, 1>}, {pipeline_mode = #tpu.pipeline_mode<synchronous>, transform_indices = @transform_11, window_bounds = array<i64: 18, 25>}, {pipeline_mode = #tpu.pipeline_mode<synchronous>, transform_indices = @transform_12, window_bounds = array<i64: 18, 1>}, {transform_indices = @transform_13, window_bounds = array<i64: 128, 18>}]} {
    %c0 = arith.constant 0 : index
    %c0_0 = arith.constant 0 : index
    %0 = vector.load %arg1[%c0, %c0_0] : memref<128x54xf32, #tpu.memory_space<vmem>>, vector<128x54xf32>
    %c0_1 = arith.constant 0 : index
    %c0_2 = arith.constant 0 : index
    %1 = vector.load %arg2[%c0_1, %c0_2] : memref<25x54xf32, #tpu.memory_space<vmem>>, vector<25x54xf32>
    %c0_3 = arith.constant 0 : index
    %c0_4 = arith.constant 0 : index
    %2 = vector.load %arg3[%c0_3, %c0_4] : memref<25x1xf32, #tpu.memory_space<vmem>>, vector<25x1xf32>
    %cst = arith.constant dense<0.000000e+00> : vector<25x128xf32>
    %3 = tpu.matmul %1, %0, %cst {dimension_numbers = #tpu.dot_dimension_numbers<[1], [1], [0], [0], [0, 0, 1, 0], [], []>} : vector<25x54xf32>, vector<128x54xf32>, vector<25x128xf32> -> vector<25x128xf32>
    %4 = vector.broadcast %2 : vector<25x1xf32> to vector<25x128xf32>
    %5 = arith.addf %3, %4 : vector<25x128xf32>
    %6 = math.tanh %5 : vector<25x128xf32>
    %c0_5 = arith.constant 0 : index
    %c0_6 = arith.constant 0 : index
    %7 = vector.load %arg4[%c0_5, %c0_6] : memref<20x25xf32, #tpu.memory_space<vmem>>, vector<20x25xf32>
    %c0_7 = arith.constant 0 : index
    %c0_8 = arith.constant 0 : index
    %8 = vector.load %arg5[%c0_7, %c0_8] : memref<20x1xf32, #tpu.memory_space<vmem>>, vector<20x1xf32>
    %cst_9 = arith.constant dense<0.000000e+00> : vector<20x128xf32>
    %9 = tpu.matmul %7, %6, %cst_9 {dimension_numbers = #tpu.dot_dimension_numbers<[1], [0], [0], [1], [0, 0, 1, 1], [], []>} : vector<20x25xf32>, vector<25x128xf32>, vector<20x128xf32> -> vector<20x128xf32>
    %10 = vector.broadcast %8 : vector<20x1xf32> to vector<20x128xf32>
    %11 = arith.addf %9, %10 : vector<20x128xf32>
    %12 = math.tanh %11 : vector<20x128xf32>
    %c0_10 = arith.constant 0 : index
    %c0_11 = arith.constant 0 : index
    %13 = vector.load %arg6[%c0_10, %c0_11] : memref<15x20xf32, #tpu.memory_space<vmem>>, vector<15x20xf32>
    %c0_12 = arith.constant 0 : index
    %c0_13 = arith.constant 0 : index
    %14 = vector.load %arg7[%c0_12, %c0_13] : memref<15x1xf32, #tpu.memory_space<vmem>>, vector<15x1xf32>
    %cst_14 = arith.constant dense<0.000000e+00> : vector<15x128xf32>
    %15 = tpu.matmul %13, %12, %cst_14 {dimension_numbers = #tpu.dot_dimension_numbers<[1], [0], [0], [1], [0, 0, 1, 1], [], []>} : vector<15x20xf32>, vector<20x128xf32>, vector<15x128xf32> -> vector<15x128xf32>
    %16 = vector.broadcast %14 : vector<15x1xf32> to vector<15x128xf32>
    %17 = arith.addf %15, %16 : vector<15x128xf32>
    %18 = math.tanh %17 : vector<15x128xf32>
    %c0_15 = arith.constant 0 : index
    %c0_16 = arith.constant 0 : index
    %19 = vector.load %arg8[%c0_15, %c0_16] : memref<20x15xf32, #tpu.memory_space<vmem>>, vector<20x15xf32>
    %c0_17 = arith.constant 0 : index
    %c0_18 = arith.constant 0 : index
    %20 = vector.load %arg9[%c0_17, %c0_18] : memref<20x1xf32, #tpu.memory_space<vmem>>, vector<20x1xf32>
    %cst_19 = arith.constant dense<0.000000e+00> : vector<20x128xf32>
    %21 = tpu.matmul %19, %18, %cst_19 {dimension_numbers = #tpu.dot_dimension_numbers<[1], [0], [0], [1], [0, 0, 1, 1], [], []>} : vector<20x15xf32>, vector<15x128xf32>, vector<20x128xf32> -> vector<20x128xf32>
    %22 = vector.broadcast %20 : vector<20x1xf32> to vector<20x128xf32>
    %23 = arith.addf %21, %22 : vector<20x128xf32>
    %24 = math.tanh %23 : vector<20x128xf32>
    %c0_20 = arith.constant 0 : index
    %c0_21 = arith.constant 0 : index
    %25 = vector.load %arg10[%c0_20, %c0_21] : memref<25x20xf32, #tpu.memory_space<vmem>>, vector<25x20xf32>
    %c0_22 = arith.constant 0 : index
    %c0_23 = arith.constant 0 : index
    %26 = vector.load %arg11[%c0_22, %c0_23] : memref<25x1xf32, #tpu.memory_space<vmem>>, vector<25x1xf32>
    %cst_24 = arith.constant dense<0.000000e+00> : vector<25x128xf32>
    %27 = tpu.matmul %25, %24, %cst_24 {dimension_numbers = #tpu.dot_dimension_numbers<[1], [0], [0], [1], [0, 0, 1, 1], [], []>} : vector<25x20xf32>, vector<20x128xf32>, vector<25x128xf32> -> vector<25x128xf32>
    %28 = vector.broadcast %26 : vector<25x1xf32> to vector<25x128xf32>
    %29 = arith.addf %27, %28 : vector<25x128xf32>
    %30 = math.tanh %29 : vector<25x128xf32>
    %c0_25 = arith.constant 0 : index
    %c0_26 = arith.constant 0 : index
    %31 = vector.load %arg12[%c0_25, %c0_26] : memref<18x25xf32, #tpu.memory_space<vmem>>, vector<18x25xf32>
    %c0_27 = arith.constant 0 : index
    %c0_28 = arith.constant 0 : index
    %32 = vector.load %arg13[%c0_27, %c0_28] : memref<18x1xf32, #tpu.memory_space<vmem>>, vector<18x1xf32>
    %cst_29 = arith.constant dense<0.000000e+00> : vector<18x128xf32>
    %33 = tpu.matmul %31, %30, %cst_29 {dimension_numbers = #tpu.dot_dimension_numbers<[1], [0], [0], [1], [0, 0, 1, 1], [], []>} : vector<18x25xf32>, vector<25x128xf32>, vector<18x128xf32> -> vector<18x128xf32>
    %34 = vector.broadcast %32 : vector<18x1xf32> to vector<18x128xf32>
    %35 = arith.addf %33, %34 : vector<18x128xf32>
    %cst_30 = arith.constant 5.000000e-01 : f32
    %36 = vector.broadcast %cst_30 : f32 to vector<18x128xf32>
    %37 = arith.mulf %36, %35 : vector<18x128xf32>
    %38 = math.tanh %37 : vector<18x128xf32>
    %cst_31 = arith.constant 1.000000e+00 : f32
    %39 = vector.broadcast %cst_31 : f32 to vector<18x128xf32>
    %40 = arith.addf %38, %39 : vector<18x128xf32>
    %cst_32 = arith.constant 5.000000e-01 : f32
    %41 = vector.broadcast %cst_32 : f32 to vector<18x128xf32>
    %42 = arith.mulf %41, %40 : vector<18x128xf32>
    %43 = tpu.transpose %42, [1, 0] : vector<18x128xf32> -> vector<128x18xf32>
    %c0_33 = arith.constant 0 : index
    %c0_34 = arith.constant 0 : index
    %44 = vector.load %arg14[%c0_33, %c0_34] : memref<128x18xf32, #tpu.memory_space<vmem>>, vector<128x18xf32>
    tpu.vector_store %arg14[%c0_33, %c0_34], %43 {strides = array<i32>} : memref<128x18xf32, #tpu.memory_space<vmem>>, vector<128x18xf32>,
    return
  }
  func.func @transform_0(%arg0: i32) -> (i32, i32) {
    %c0_i32 = arith.constant 0 : i32
    %c0_i32_0 = arith.constant 0 : i32
    return %arg0, %c0_i32 : i32, i32
  }
  func.func @transform_1(%arg0: i32) -> (i32, i32) {
    %c0_i32 = arith.constant 0 : i32
    %c0_i32_0 = arith.constant 0 : i32
    %c0_i32_1 = arith.constant 0 : i32
    return %c0_i32, %c0_i32_0 : i32, i32
  }
  func.func @transform_2(%arg0: i32) -> (i32, i32) {
    %c0_i32 = arith.constant 0 : i32
    %c0_i32_0 = arith.constant 0 : i32
    %c0_i32_1 = arith.constant 0 : i32
    return %c0_i32, %c0_i32_0 : i32, i32
  }
  func.func @transform_3(%arg0: i32) -> (i32, i32) {
    %c0_i32 = arith.constant 0 : i32
    %c0_i32_0 = arith.constant 0 : i32
    %c0_i32_1 = arith.constant 0 : i32
    return %c0_i32, %c0_i32_0 : i32, i32
  }
  func.func @transform_4(%arg0: i32) -> (i32, i32) {
    %c0_i32 = arith.constant 0 : i32
    %c0_i32_0 = arith.constant 0 : i32
    %c0_i32_1 = arith.constant 0 : i32
    return %c0_i32, %c0_i32_0 : i32, i32
  }
  func.func @transform_5(%arg0: i32) -> (i32, i32) {
    %c0_i32 = arith.constant 0 : i32
    %c0_i32_0 = arith.constant 0 : i32
    %c0_i32_1 = arith.constant 0 : i32
    return %c0_i32, %c0_i32_0 : i32, i32
  }
  func.func @transform_6(%arg0: i32) -> (i32, i32) {
    %c0_i32 = arith.constant 0 : i32
    %c0_i32_0 = arith.constant 0 : i32
    %c0_i32_1 = arith.constant 0 : i32
    return %c0_i32, %c0_i32_0 : i32, i32
  }
  func.func @transform_7(%arg0: i32) -> (i32, i32) {
    %c0_i32 = arith.constant 0 : i32
    %c0_i32_0 = arith.constant 0 : i32
    %c0_i32_1 = arith.constant 0 : i32
    return %c0_i32, %c0_i32_0 : i32, i32
  }
  func.func @transform_8(%arg0: i32) -> (i32, i32) {
    %c0_i32 = arith.constant 0 : i32
    %c0_i32_0 = arith.constant 0 : i32
    %c0_i32_1 = arith.constant 0 : i32
    return %c0_i32, %c0_i32_0 : i32, i32
  }
  func.func @transform_9(%arg0: i32) -> (i32, i32) {
    %c0_i32 = arith.constant 0 : i32
    %c0_i32_0 = arith.constant 0 : i32
    %c0_i32_1 = arith.constant 0 : i32
    return %c0_i32, %c0_i32_0 : i32, i32
  }
  func.func @transform_10(%arg0: i32) -> (i32, i32) {
    %c0_i32 = arith.constant 0 : i32
    %c0_i32_0 = arith.constant 0 : i32
    %c0_i32_1 = arith.constant 0 : i32
    return %c0_i32, %c0_i32_0 : i32, i32
  }
  func.func @transform_11(%arg0: i32) -> (i32, i32) {
    %c0_i32 = arith.constant 0 : i32
    %c0_i32_0 = arith.constant 0 : i32
    %c0_i32_1 = arith.constant 0 : i32
    return %c0_i32, %c0_i32_0 : i32, i32
  }
  func.func @transform_12(%arg0: i32) -> (i32, i32) {
    %c0_i32 = arith.constant 0 : i32
    %c0_i32_0 = arith.constant 0 : i32
    %c0_i32_1 = arith.constant 0 : i32
    return %c0_i32, %c0_i32_0 : i32, i32
  }
  func.func @transform_13(%arg0: i32) -> (i32, i32) {
    %c0_i32 = arith.constant 0 : i32
    %c0_i32_0 = arith.constant 0 : i32
    return %arg0, %c0_i32 : i32, i32
  }
}

</mosaic_0001>

<llo_original>
// kernel: tpu_custom_call.1
$region0: #{tpu_custom_call.1}
  #allocation0 [shape = 'u32[]', space=smem, size = 0x4, offset = 0x4, fixed_abs, tag = 'smem constant byte address 0x4 - core index']
  #allocation1 [shape = 'u32[144,128]{1,0:T(1,128)}', space=vmem, size = 0x12000, scoped, tag = 'internal scratch']
  %s0 = inlined_call_operand.vmem [shape: f32[128,54], index: 0, kind: input, shape index: {}]
  %s1 = inlined_call_operand.vmem [shape: f32[25,54], index: 1, kind: input, shape index: {}]
  %s2 = inlined_call_operand.vmem [shape: f32[25,1], index: 2, kind: input, shape index: {}]
  %s3 = inlined_call_operand.vmem [shape: f32[20,25], index: 3, kind: input, shape index: {}]
  %s4 = inlined_call_operand.vmem [shape: f32[20,1], index: 4, kind: input, shape index: {}]
  %s5 = inlined_call_operand.vmem [shape: f32[15,20], index: 5, kind: input, shape index: {}]
  %s6 = inlined_call_operand.vmem [shape: f32[15,1], index: 6, kind: input, shape index: {}]
  %s7 = inlined_call_operand.vmem [shape: f32[20,15], index: 7, kind: input, shape index: {}]
  %s8 = inlined_call_operand.vmem [shape: f32[20,1], index: 8, kind: input, shape index: {}]
  %s9 = inlined_call_operand.vmem [shape: f32[25,20], index: 9, kind: input, shape index: {}]
  %s10 = inlined_call_operand.vmem [shape: f32[25,1], index: 10, kind: input, shape index: {}]
  %s11 = inlined_call_operand.vmem [shape: f32[18,25], index: 11, kind: input, shape index: {}]
  %s12 = inlined_call_operand.vmem [shape: f32[18,1], index: 12, kind: input, shape index: {}]
  %s13 = inlined_call_operand.vmem [shape: f32[128,18], index: 13, kind: output, shape index: {}]
  %s14 = sld [smem:[#allocation0]]
  $region62: #{tpu_custom_call.1} parent=0
    _
  %s16 = ssub.s32 1, %s14
  %s17 = scalar_select 0, %s16, %s14
  // Predicated region
  $region2: #{tpu_custom_call.1} parent=0 // pred_check
    _
  $region3: #{tpu_custom_call.1} parent=0 // pred_check_branch
    %19 = sbr.rel (0) target = $region5
  $region4: #{tpu_custom_call.1} parent=0 // pred_region
    _
  $region5: #{tpu_custom_call.1} parent=0 // pred_fallthru
    _
  // Predicated region
  $region6: #{tpu_custom_call.1} parent=0 // pred_check
    _
  $region7: #{tpu_custom_call.1} parent=0 // pred_check_branch
    %21 = sbr.rel (0) target = $region9
  $region8: #{tpu_custom_call.1} parent=0 // pred_region
    _
  $region9: #{tpu_custom_call.1} parent=0 // pred_fallthru
    _
  // Predicated region
  $region10: #{tpu_custom_call.1} parent=0 // pred_check
    _
  $region11: #{tpu_custom_call.1} parent=0 // pred_check_branch
    %23 = sbr.rel (0) target = $region13
  $region12: #{tpu_custom_call.1} parent=0 // pred_region
    _
  $region13: #{tpu_custom_call.1} parent=0 // pred_fallthru
    _
  // Predicated region
  $region14: #{tpu_custom_call.1} parent=0 // pred_check
    _
  $region15: #{tpu_custom_call.1} parent=0 // pred_check_branch
    %25 = sbr.rel (0) target = $region17
  $region16: #{tpu_custom_call.1} parent=0 // pred_region
    _
  $region17: #{tpu_custom_call.1} parent=0 // pred_fallthru
    _
  // Predicated region
  $region18: #{tpu_custom_call.1} parent=0 // pred_check
    _
  $region19: #{tpu_custom_call.1} parent=0 // pred_check_branch
    %27 = sbr.rel (0) target = $region21
  $region20: #{tpu_custom_call.1} parent=0 // pred_region
    _
  $region21: #{tpu_custom_call.1} parent=0 // pred_fallthru
    _
  // Predicated region
  $region22: #{tpu_custom_call.1} parent=0 // pred_check
    _
  $region23: #{tpu_custom_call.1} parent=0 // pred_check_branch
    %29 = sbr.rel (0) target = $region25
  $region24: #{tpu_custom_call.1} parent=0 // pred_region
    _
  $region25: #{tpu_custom_call.1} parent=0 // pred_fallthru
    _
  // Predicated region
  $region26: #{tpu_custom_call.1} parent=0 // pred_check
    _
  $region27: #{tpu_custom_call.1} parent=0 // pred_check_branch
    %31 = sbr.rel (0) target = $region29
  $region28: #{tpu_custom_call.1} parent=0 // pred_region
    _
  $region29: #{tpu_custom_call.1} parent=0 // pred_fallthru
    _
  // Predicated region
  $region30: #{tpu_custom_call.1} parent=0 // pred_check
    _
  $region31: #{tpu_custom_call.1} parent=0 // pred_check_branch
    %33 = sbr.rel (0) target = $region33
  $region32: #{tpu_custom_call.1} parent=0 // pred_region
    _
  $region33: #{tpu_custom_call.1} parent=0 // pred_fallthru
    _
  // Predicated region
  $region34: #{tpu_custom_call.1} parent=0 // pred_check
    _
  $region35: #{tpu_custom_call.1} parent=0 // pred_check_branch
    %35 = sbr.rel (0) target = $region37
  $region36: #{tpu_custom_call.1} parent=0 // pred_region
    _
  $region37: #{tpu_custom_call.1} parent=0 // pred_fallthru
    _
  // Predicated region
  $region38: #{tpu_custom_call.1} parent=0 // pred_check
    _
  $region39: #{tpu_custom_call.1} parent=0 // pred_check_branch
    %37 = sbr.rel (0) target = $region41
  $region40: #{tpu_custom_call.1} parent=0 // pred_region
    _
  $region41: #{tpu_custom_call.1} parent=0 // pred_fallthru
    _
  // Predicated region
  $region42: #{tpu_custom_call.1} parent=0 // pred_check
    _
  $region43: #{tpu_custom_call.1} parent=0 // pred_check_branch
    %39 = sbr.rel (0) target = $region45
  $region44: #{tpu_custom_call.1} parent=0 // pred_region
    _
  $region45: #{tpu_custom_call.1} parent=0 // pred_fallthru
    _
  // Predicated region
  $region46: #{tpu_custom_call.1} parent=0 // pred_check
    _
  $region47: #{tpu_custom_call.1} parent=0 // pred_check_branch
    %41 = sbr.rel (0) target = $region49
  $region48: #{tpu_custom_call.1} parent=0 // pred_region
    _
  $region49: #{tpu_custom_call.1} parent=0 // pred_fallthru
    _
  // Predicated region
  $region50: #{tpu_custom_call.1} parent=0 // pred_check
    _
  $region51: #{tpu_custom_call.1} parent=0 // pred_check_branch
    %43 = sbr.rel (0) target = $region53
  $region52: #{tpu_custom_call.1} parent=0 // pred_region
    _
  $region53: #{tpu_custom_call.1} parent=0 // pred_fallthru
    _
  %v44 = vld [vmem:[%s0] sm:$0xff]
  %v45 = vld [vmem:[%s0 + $0x8] sm:$0xff]
  %v46 = vld [vmem:[%s0 + $0x10] sm:$0xff]
  %v47 = vld [vmem:[%s0 + $0x18] sm:$0xff]
  %v48 = vld [vmem:[%s0 + $0x20] sm:$0xff]
  %v49 = vld [vmem:[%s0 + $0x28] sm:$0xff]
  %v50 = vld [vmem:[%s0 + $0x30] sm:$0xff]
  %v51 = vld [vmem:[%s0 + $0x38] sm:$0xff]
  %v52 = vld [vmem:[%s0 + $0x40] sm:$0xff]
  %v53 = vld [vmem:[%s0 + $0x48] sm:$0xff]
  %v54 = vld [vmem:[%s0 + $0x50] sm:$0xff]
  %v55 = vld [vmem:[%s0 + $0x58] sm:$0xff]
  %v56 = vld [vmem:[%s0 + $0x60] sm:$0xff]
  %v57 = vld [vmem:[%s0 + $0x68] sm:$0xff]
  %v58 = vld [vmem:[%s0 + $0x70] sm:$0xff]
  %v59 = vld [vmem:[%s0 + $0x78] sm:$0xff]
  %v60 = vld [vmem:[%s1] sm:$0xff]
  %v61 = vld [vmem:[%s1 + $0x8] sm:$0xff]
  %v62 = vld [vmem:[%s1 + $0x10] sm:$0xff]
  %v63 = vld [vmem:[%s1 + $0x18] sm:$0x1]
  %v64 = vld [vmem:[%s2] sm:$0xff]
  %v65 = vld [vmem:[%s2 + $0x8] sm:$0xff]
  %v66 = vld [vmem:[%s2 + $0x10] sm:$0xff]
  %v67 = vld [vmem:[%s2 + $0x18] sm:$0x1]
  %69 = vset.pattern.permute.xlu0 0
  %70 = vperm.xlu0 %69, %v64
  %v71 = vpop.permute.xlu0 %70
  %74 = vset.pattern.permute.xlu0 0
  %75 = vperm.xlu0 %74, %v65
  %v76 = vpop.permute.xlu0 %75
  %79 = vset.pattern.permute.xlu0 0
  %80 = vperm.xlu0 %79, %v66
  %v81 = vpop.permute.xlu0 %80
  %84 = vset.pattern.permute.xlu0 0
  %85 = vperm.xlu0 %84, %v67
  %v86 = vpop.permute.xlu0 %85
  %vm88 = vcmask 441344
  %v90 = vsel %vm88, %v60, 0
  %v93 = vsel %vm88, %v61, 0
  %v96 = vsel %vm88, %v62, 0
  %v99 = vsel %vm88, %v63, 0
  %v102 = vsel %vm88, %v44, 0
  %v105 = vsel %vm88, %v45, 0
  %v108 = vsel %vm88, %v46, 0
  %v111 = vsel %vm88, %v47, 0
  %v114 = vsel %vm88, %v48, 0
  %v117 = vsel %vm88, %v49, 0
  %v120 = vsel %vm88, %v50, 0
  %v123 = vsel %vm88, %v51, 0
  %v126 = vsel %vm88, %v52, 0
  %v129 = vsel %vm88, %v53, 0
  %v132 = vsel %vm88, %v54, 0
  %v135 = vsel %vm88, %v55, 0
  %v138 = vsel %vm88, %v56, 0
  %v141 = vsel %vm88, %v57, 0
  %v144 = vsel %vm88, %v58, 0
  %v147 = vsel %vm88, %v59, 0
  %149 = vmatprep.subr.mxu0 0.0
  %150 = vmatpush1.xpose.msra.mxu0 %v147
  %151 = vmatprep.subr.mxu0 0.0
  %152 = vmatpush1.xpose.msra.mxu0 %v144
  %153 = vmatprep.subr.mxu0 0.0
  %154 = vmatpush1.xpose.msra.mxu0 %v141
  %155 = vmatprep.subr.mxu0 0.0
  %156 = vmatpush1.xpose.msra.mxu0 %v138
  %157 = vmatprep.subr.mxu0 0.0
  %158 = vmatpush1.xpose.msra.mxu0 %v135
  %159 = vmatprep.subr.mxu0 0.0
  %160 = vmatpush1.xpose.msra.mxu0 %v132
  %161 = vmatprep.subr.mxu0 0.0
  %162 = vmatpush1.xpose.msra.mxu0 %v129
  %163 = vmatprep.subr.mxu0 0.0
  %164 = vmatpush1.xpose.msra.mxu0 %v126
  %165 = vmatprep.subr.mxu0 0.0
  %166 = vmatpush1.xpose.msra.mxu0 %v123
  %167 = vmatprep.subr.mxu0 0.0
  %168 = vmatpush1.xpose.msra.mxu0 %v120
  %169 = vmatprep.subr.mxu0 0.0
  %170 = vmatpush1.xpose.msra.mxu0 %v117
  %171 = vmatprep.subr.mxu0 0.0
  %172 = vmatpush1.xpose.msra.mxu0 %v114
  %173 = vmatprep.subr.mxu0 0.0
  %174 = vmatpush1.xpose.msra.mxu0 %v111
  %175 = vmatprep.subr.mxu0 0.0
  %176 = vmatpush1.xpose.msra.mxu0 %v108
  %177 = vmatprep.subr.mxu0 0.0
  %178 = vmatpush1.xpose.msra.mxu0 %v105
  %179 = vmatprep.subr.mxu0 0.0
  %180 = vmatpush1.xpose.msra.mxu0 %v102
  %181 = vmatprep.subr.mxu0 0.0
  %182 = vmatpush2.xpose.msra.mxu0 0.0
  %183 = vmatprep.subr.mxu0 0.0
  %184 = vmatpush2.xpose.msra.mxu0 0.0
  %185 = vmatprep.subr.mxu0 0.0
  %186 = vmatpush2.xpose.msra.mxu0 0.0
  %187 = vmatprep.subr.mxu0 0.0
  %188 = vmatpush2.xpose.msra.mxu0 0.0
  %189 = vmatprep.subr.mxu0 0.0
  %190 = vmatpush2.xpose.msra.mxu0 0.0
  %191 = vmatprep.subr.mxu0 0.0
  %192 = vmatpush2.xpose.msra.mxu0 0.0
  %193 = vmatprep.subr.mxu0 0.0
  %194 = vmatpush2.xpose.msra.mxu0 0.0
  %195 = vmatprep.subr.mxu0 0.0
  %196 = vmatpush2.xpose.msra.mxu0 0.0
  %197 = vmatprep.subr.mxu0 0.0
  %198 = vmatpush2.xpose.msra.mxu0 0.0
  %199 = vmatprep.subr.mxu0 0.0
  %200 = vmatpush2.xpose.msra.mxu0 0.0
  %201 = vmatprep.subr.mxu0 0.0
  %202 = vmatpush2.xpose.msra.mxu0 0.0
  %203 = vmatprep.subr.mxu0 0.0
  %204 = vmatpush2.xpose.msra.mxu0 0.0
  %205 = vmatprep.subr.mxu0 0.0
  %206 = vmatpush2.xpose.msra.mxu0 0.0
  %207 = vmatprep.subr.mxu0 0.0
  %208 = vmatpush2.xpose.msra.mxu0 0.0
  %209 = vmatprep.subr.mxu0 0.0
  %210 = vmatpush2.xpose.msra.mxu0 0.0
  %211 = vmatprep.subr.mxu0 0.0
  %212 = vmatpush2.xpose.msra.mxu0 0.0
  %213 = vmatprep.mubr.f32.mxu0 0.0
  %214 = vmatmul.mubr.f32.gmra.mxu0 %v90
  %v215 = vpop.f32.mrf.mxu0
  %v216 = vadd.f32 %v71, %v215
  %v217 = vpop.f32.mrf.mxu0
  %218 = vmatprep.mubr.f32.mxu0 0.0
  %219 = vmatmul.mubr.f32.gmra.mxu0 %v93
  %v220 = vpop.f32.mrf.mxu0
  %v221 = vadd.f32 %v76, %v220
  %v222 = vpop.f32.mrf.mxu0
  %223 = vmatprep.mubr.f32.mxu0 0.0
  %224 = vmatmul.mubr.f32.gmra.mxu0 %v96
  %v225 = vpop.f32.mrf.mxu0
  %v226 = vadd.f32 %v81, %v225
  %v227 = vpop.f32.mrf.mxu0
  %228 = vmatprep.mubr.f32.mxu0 0.0
  %229 = vmatmul.mubr.f32.gmra.mxu0 %v99
  %v230 = vpop.f32.mrf.mxu0
  %v231 = vadd.f32 %v86, %v230
  %v232 = vpop.f32.mrf.mxu0
  %233 = vdwg.mxu0
  %v234 = vtanh.pop %v216
  %v235 = vtanh.pop %v221
  %v236 = vtanh.pop %v226
  %v237 = vtanh.pop %v231
  %v238 = vld [vmem:[%s3] sm:$0xff]
  %v239 = vld [vmem:[%s3 + $0x8] sm:$0xff]
  %v240 = vld [vmem:[%s3 + $0x10] sm:$0xf]
  %v241 = vld [vmem:[%s4] sm:$0xff]
  %v242 = vld [vmem:[%s4 + $0x8] sm:$0xff]
  %v243 = vld [vmem:[%s4 + $0x10] sm:$0xf]
  %245 = vset.pattern.permute.xlu0 0
  %246 = vperm.xlu0 %245, %v241
  %v247 = vpop.permute.xlu0 %246
  %250 = vset.pattern.permute.xlu0 0
  %251 = vperm.xlu0 %250, %v242
  %v252 = vpop.permute.xlu0 %251
  %255 = vset.pattern.permute.xlu0 0
  %256 = vperm.xlu0 %255, %v243
  %v257 = vpop.permute.xlu0 %256
  %vm259 = vcmask 203776
  %v261 = vsel %vm259, %v238, 0
  %v264 = vsel %vm259, %v239, 0
  %v267 = vsel %vm259, %v240, 0
  %vm269 = vcmask 1040384
  %v271 = vsel %vm269, %v237, 0
  %273 = vmatprep.subr.mxu0 0.0
  %274 = vmatpush1.msra.mxu0 0.0
  %275 = vmatprep.subr.mxu0 0.0
  %276 = vmatpush1.msra.mxu0 0.0
  %277 = vmatprep.subr.mxu0 0.0
  %278 = vmatpush1.msra.mxu0 0.0
  %279 = vmatprep.subr.mxu0 0.0
  %280 = vmatpush1.msra.mxu0 0.0
  %281 = vmatprep.subr.mxu0 0.0
  %282 = vmatpush1.msra.mxu0 0.0
  %283 = vmatprep.subr.mxu0 0.0
  %284 = vmatpush1.msra.mxu0 0.0
  %285 = vmatprep.subr.mxu0 0.0
  %286 = vmatpush1.msra.mxu0 0.0
  %287 = vmatprep.subr.mxu0 0.0
  %288 = vmatpush1.msra.mxu0 0.0
  %289 = vmatprep.subr.mxu0 0.0
  %290 = vmatpush1.msra.mxu0 0.0
  %291 = vmatprep.subr.mxu0 0.0
  %292 = vmatpush1.msra.mxu0 0.0
  %293 = vmatprep.subr.mxu0 0.0
  %294 = vmatpush1.msra.mxu0 0.0
  %295 = vmatprep.subr.mxu0 0.0
  %296 = vmatpush1.msra.mxu0 0.0
  %297 = vmatprep.subr.mxu0 0.0
  %298 = vmatpush1.msra.mxu0 %v271
  %299 = vmatprep.subr.mxu0 0.0
  %300 = vmatpush1.msra.mxu0 %v236
  %301 = vmatprep.subr.mxu0 0.0
  %302 = vmatpush1.msra.mxu0 %v235
  %303 = vmatprep.subr.mxu0 0.0
  %304 = vmatpush1.msra.mxu0 %v234
  %305 = vmatprep.subr.mxu0 0.0
  %306 = vmatpush2.msra.mxu0 0.0
  %307 = vmatprep.subr.mxu0 0.0
  %308 = vmatpush2.msra.mxu0 0.0
  %309 = vmatprep.subr.mxu0 0.0
  %310 = vmatpush2.msra.mxu0 0.0
  %311 = vmatprep.subr.mxu0 0.0
  %312 = vmatpush2.msra.mxu0 0.0
  %313 = vmatprep.subr.mxu0 0.0
  %314 = vmatpush2.msra.mxu0 0.0
  %315 = vmatprep.subr.mxu0 0.0
  %316 = vmatpush2.msra.mxu0 0.0
  %317 = vmatprep.subr.mxu0 0.0
  %318 = vmatpush2.msra.mxu0 0.0
  %319 = vmatprep.subr.mxu0 0.0
  %320 = vmatpush2.msra.mxu0 0.0
  %321 = vmatprep.subr.mxu0 0.0
  %322 = vmatpush2.msra.mxu0 0.0
  %323 = vmatprep.subr.mxu0 0.0
  %324 = vmatpush2.msra.mxu0 0.0
  %325 = vmatprep.subr.mxu0 0.0
  %326 = vmatpush2.msra.mxu0 0.0
  %327 = vmatprep.subr.mxu0 0.0
  %328 = vmatpush2.msra.mxu0 0.0
  %329 = vmatprep.subr.mxu0 0.0
  %330 = vmatpush2.msra.mxu0 0.0
  %331 = vmatprep.subr.mxu0 0.0
  %332 = vmatpush2.msra.mxu0 0.0
  %333 = vmatprep.subr.mxu0 0.0
  %334 = vmatpush2.msra.mxu0 0.0
  %335 = vmatprep.subr.mxu0 0.0
  %336 = vmatpush2.msra.mxu0 0.0
  %337 = vmatprep.mubr.f32.mxu0 0.0
  %338 = vmatmul.mubr.f32.gmra.mxu0 %v261
  %v339 = vpop.f32.mrf.mxu0
  %v340 = vadd.f32 %v247, %v339
  %v341 = vpop.f32.mrf.mxu0
  %342 = vmatprep.mubr.f32.mxu0 0.0
  %343 = vmatmul.mubr.f32.gmra.mxu0 %v264
  %v344 = vpop.f32.mrf.mxu0
  %v345 = vadd.f32 %v252, %v344
  %v346 = vpop.f32.mrf.mxu0
  %347 = vmatprep.mubr.f32.mxu0 0.0
  %348 = vmatmul.mubr.f32.gmra.mxu0 %v267
  %v349 = vpop.f32.mrf.mxu0
  %v350 = vadd.f32 %v257, %v349
  %v351 = vpop.f32.mrf.mxu0
  %352 = vdwg.mxu0
  %v353 = vtanh.pop %v340
  %v354 = vtanh.pop %v345
  %v355 = vtanh.pop %v350
  %v356 = vld [vmem:[%s5] sm:$0xff]
  %v357 = vld [vmem:[%s5 + $0x8] sm:$0x7f]
  %v358 = vld [vmem:[%s6] sm:$0xff]
  %v359 = vld [vmem:[%s6 + $0x8] sm:$0x7f]
  %361 = vset.pattern.permute.xlu0 0
  %362 = vperm.xlu0 %361, %v358
  %v363 = vpop.permute.xlu0 %362
  %366 = vset.pattern.permute.xlu0 0
  %367 = vperm.xlu0 %366, %v359
  %v368 = vpop.permute.xlu0 %367
  %vm370 = vcmask 162816
  %v372 = vsel %vm370, %v356, 0
  %v375 = vsel %vm370, %v357, 0
  %vm377 = vcmask 1043456
  %v379 = vsel %vm377, %v355, 0
  %381 = vmatprep.subr.mxu0 0.0
  %382 = vmatpush1.msra.mxu0 0.0
  %383 = vmatprep.subr.mxu0 0.0
  %384 = vmatpush1.msra.mxu0 0.0
  %385 = vmatprep.subr.mxu0 0.0
  %386 = vmatpush1.msra.mxu0 0.0
  %387 = vmatprep.subr.mxu0 0.0
  %388 = vmatpush1.msra.mxu0 0.0
  %389 = vmatprep.subr.mxu0 0.0
  %390 = vmatpush1.msra.mxu0 0.0
  %391 = vmatprep.subr.mxu0 0.0
  %392 = vmatpush1.msra.mxu0 0.0
  %393 = vmatprep.subr.mxu0 0.0
  %394 = vmatpush1.msra.mxu0 0.0
  %395 = vmatprep.subr.mxu0 0.0
  %396 = vmatpush1.msra.mxu0 0.0
  %397 = vmatprep.subr.mxu0 0.0
  %398 = vmatpush1.msra.mxu0 0.0
  %399 = vmatprep.subr.mxu0 0.0
  %400 = vmatpush1.msra.mxu0 0.0
  %401 = vmatprep.subr.mxu0 0.0
  %402 = vmatpush1.msra.mxu0 0.0
  %403 = vmatprep.subr.mxu0 0.0
  %404 = vmatpush1.msra.mxu0 0.0
  %405 = vmatprep.subr.mxu0 0.0
  %406 = vmatpush1.msra.mxu0 0.0
  %407 = vmatprep.subr.mxu0 0.0
  %408 = vmatpush1.msra.mxu0 %v379
  %409 = vmatprep.subr.mxu0 0.0
  %410 = vmatpush1.msra.mxu0 %v354
  %411 = vmatprep.subr.mxu0 0.0
  %412 = vmatpush1.msra.mxu0 %v353
  %413 = vmatprep.subr.mxu0 0.0
  %414 = vmatpush2.msra.mxu0 0.0
  %415 = vmatprep.subr.mxu0 0.0
  %416 = vmatpush2.msra.mxu0 0.0
  %417 = vmatprep.subr.mxu0 0.0
  %418 = vmatpush2.msra.mxu0 0.0
  %419 = vmatprep.subr.mxu0 0.0
  %420 = vmatpush2.msra.mxu0 0.0
  %421 = vmatprep.subr.mxu0 0.0
  %422 = vmatpush2.msra.mxu0 0.0
  %423 = vmatprep.subr.mxu0 0.0
  %424 = vmatpush2.msra.mxu0 0.0
  %425 = vmatprep.subr.mxu0 0.0
  %426 = vmatpush2.msra.mxu0 0.0
  %427 = vmatprep.subr.mxu0 0.0
  %428 = vmatpush2.msra.mxu0 0.0
  %429 = vmatprep.subr.mxu0 0.0
  %430 = vmatpush2.msra.mxu0 0.0
  %431 = vmatprep.subr.mxu0 0.0
  %432 = vmatpush2.msra.mxu0 0.0
  %433 = vmatprep.subr.mxu0 0.0
  %434 = vmatpush2.msra.mxu0 0.0
  %435 = vmatprep.subr.mxu0 0.0
  %436 = vmatpush2.msra.mxu0 0.0
  %437 = vmatprep.subr.mxu0 0.0
  %438 = vmatpush2.msra.mxu0 0.0
  %439 = vmatprep.subr.mxu0 0.0
  %440 = vmatpush2.msra.mxu0 0.0
  %441 = vmatprep.subr.mxu0 0.0
  %442 = vmatpush2.msra.mxu0 0.0
  %443 = vmatprep.subr.mxu0 0.0
  %444 = vmatpush2.msra.mxu0 0.0
  %445 = vmatprep.mubr.f32.mxu0 0.0
  %446 = vmatmul.mubr.f32.gmra.mxu0 %v372
  %v447 = vpop.f32.mrf.mxu0
  %v448 = vadd.f32 %v363, %v447
  %v449 = vpop.f32.mrf.mxu0
  %450 = vmatprep.mubr.f32.mxu0 0.0
  %451 = vmatmul.mubr.f32.gmra.mxu0 %v375
  %v452 = vpop.f32.mrf.mxu0
  %v453 = vadd.f32 %v368, %v452
  %v454 = vpop.f32.mrf.mxu0
  %455 = vdwg.mxu0
  %v456 = vtanh.pop %v448
  %v457 = vtanh.pop %v453
  %v458 = vld [vmem:[%s7] sm:$0xff]
  %v459 = vld [vmem:[%s7 + $0x8] sm:$0xff]
  %v460 = vld [vmem:[%s7 + $0x10] sm:$0xf]
  %v461 = vld [vmem:[%s8] sm:$0xff]
  %v462 = vld [vmem:[%s8 + $0x8] sm:$0xff]
  %v463 = vld [vmem:[%s8 + $0x10] sm:$0xf]
  %465 = vset.pattern.permute.xlu0 0
  %466 = vperm.xlu0 %465, %v461
  %v467 = vpop.permute.xlu0 %466
  %470 = vset.pattern.permute.xlu0 0
  %471 = vperm.xlu0 %470, %v462
  %v472 = vpop.permute.xlu0 %471
  %475 = vset.pattern.permute.xlu0 0
  %476 = vperm.xlu0 %475, %v463
  %v477 = vpop.permute.xlu0 %476
  %vm479 = vcmask 121856
  %v481 = vsel %vm479, %v458, 0
  %v484 = vsel %vm479, %v459, 0
  %v487 = vsel %vm479, %v460, 0
  %vm489 = vcmask 1046528
  %v491 = vsel %vm489, %v457, 0
  %493 = vmatprep.subr.mxu0 0.0
  %494 = vmatpush1.msra.mxu0 0.0
  %495 = vmatprep.subr.mxu0 0.0
  %496 = vmatpush1.msra.mxu0 0.0
  %497 = vmatprep.subr.mxu0 0.0
  %498 = vmatpush1.msra.mxu0 0.0
  %499 = vmatprep.subr.mxu0 0.0
  %500 = vmatpush1.msra.mxu0 0.0
  %501 = vmatprep.subr.mxu0 0.0
  %502 = vmatpush1.msra.mxu0 0.0
  %503 = vmatprep.subr.mxu0 0.0
  %504 = vmatpush1.msra.mxu0 0.0
  %505 = vmatprep.subr.mxu0 0.0
  %506 = vmatpush1.msra.mxu0 0.0
  %507 = vmatprep.subr.mxu0 0.0
  %508 = vmatpush1.msra.mxu0 0.0
  %509 = vmatprep.subr.mxu0 0.0
  %510 = vmatpush1.msra.mxu0 0.0
  %511 = vmatprep.subr.mxu0 0.0
  %512 = vmatpush1.msra.mxu0 0.0
  %513 = vmatprep.subr.mxu0 0.0
  %514 = vmatpush1.msra.mxu0 0.0
  %515 = vmatprep.subr.mxu0 0.0
  %516 = vmatpush1.msra.mxu0 0.0
  %517 = vmatprep.subr.mxu0 0.0
  %518 = vmatpush1.msra.mxu0 0.0
  %519 = vmatprep.subr.mxu0 0.0
  %520 = vmatpush1.msra.mxu0 0.0
  %521 = vmatprep.subr.mxu0 0.0
  %522 = vmatpush1.msra.mxu0 %v491
  %523 = vmatprep.subr.mxu0 0.0
  %524 = vmatpush1.msra.mxu0 %v456
  %525 = vmatprep.subr.mxu0 0.0
  %526 = vmatpush2.msra.mxu0 0.0
  %527 = vmatprep.subr.mxu0 0.0
  %528 = vmatpush2.msra.mxu0 0.0
  %529 = vmatprep.subr.mxu0 0.0
  %530 = vmatpush2.msra.mxu0 0.0
  %531 = vmatprep.subr.mxu0 0.0
  %532 = vmatpush2.msra.mxu0 0.0
  %533 = vmatprep.subr.mxu0 0.0
  %534 = vmatpush2.msra.mxu0 0.0
  %535 = vmatprep.subr.mxu0 0.0
  %536 = vmatpush2.msra.mxu0 0.0
  %537 = vmatprep.subr.mxu0 0.0
  %538 = vmatpush2.msra.mxu0 0.0
  %539 = vmatprep.subr.mxu0 0.0
  %540 = vmatpush2.msra.mxu0 0.0
  %541 = vmatprep.subr.mxu0 0.0
  %542 = vmatpush2.msra.mxu0 0.0
  %543 = vmatprep.subr.mxu0 0.0
  %544 = vmatpush2.msra.mxu0 0.0
  %545 = vmatprep.subr.mxu0 0.0
  %546 = vmatpush2.msra.mxu0 0.0
  %547 = vmatprep.subr.mxu0 0.0
  %548 = vmatpush2.msra.mxu0 0.0
  %549 = vmatprep.subr.mxu0 0.0
  %550 = vmatpush2.msra.mxu0 0.0
  %551 = vmatprep.subr.mxu0 0.0
  %552 = vmatpush2.msra.mxu0 0.0
  %553 = vmatprep.subr.mxu0 0.0
  %554 = vmatpush2.msra.mxu0 0.0
  %555 = vmatprep.subr.mxu0 0.0
  %556 = vmatpush2.msra.mxu0 0.0
  %557 = vmatprep.mubr.f32.mxu0 0.0
  %558 = vmatmul.mubr.f32.gmra.mxu0 %v481
  %v559 = vpop.f32.mrf.mxu0
  %v560 = vadd.f32 %v467, %v559
  %v561 = vpop.f32.mrf.mxu0
  %562 = vmatprep.mubr.f32.mxu0 0.0
  %563 = vmatmul.mubr.f32.gmra.mxu0 %v484
  %v564 = vpop.f32.mrf.mxu0
  %v565 = vadd.f32 %v472, %v564
  %v566 = vpop.f32.mrf.mxu0
  %567 = vmatprep.mubr.f32.mxu0 0.0
  %568 = vmatmul.mubr.f32.gmra.mxu0 %v487
  %v569 = vpop.f32.mrf.mxu0
  %v570 = vadd.f32 %v477, %v569
  %v571 = vpop.f32.mrf.mxu0
  %572 = vdwg.mxu0
  %v573 = vtanh.pop %v560
  %v574 = vtanh.pop %v565
  %v575 = vtanh.pop %v570
  %v576 = vld [vmem:[%s9] sm:$0xff]
  %v577 = vld [vmem:[%s9 + $0x8] sm:$0xff]
  %v578 = vld [vmem:[%s9 + $0x10] sm:$0xff]
  %v579 = vld [vmem:[%s9 + $0x18] sm:$0x1]
  %v580 = vld [vmem:[%s10] sm:$0xff]
  %v581 = vld [vmem:[%s10 + $0x8] sm:$0xff]
  %v582 = vld [vmem:[%s10 + $0x10] sm:$0xff]
  %v583 = vld [vmem:[%s10 + $0x18] sm:$0x1]
  %585 = vset.pattern.permute.xlu0 0
  %586 = vperm.xlu0 %585, %v580
  %v587 = vpop.permute.xlu0 %586
  %590 = vset.pattern.permute.xlu0 0
  %591 = vperm.xlu0 %590, %v581
  %v592 = vpop.permute.xlu0 %591
  %595 = vset.pattern.permute.xlu0 0
  %596 = vperm.xlu0 %595, %v582
  %v597 = vpop.permute.xlu0 %596
  %600 = vset.pattern.permute.xlu0 0
  %601 = vperm.xlu0 %600, %v583
  %v602 = vpop.permute.xlu0 %601
  %v605 = vsel %vm370, %v576, 0
  %v608 = vsel %vm370, %v577, 0
  %v611 = vsel %vm370, %v578, 0
  %v614 = vsel %vm370, %v579, 0
  %v617 = vsel %vm377, %v575, 0
  %619 = vmatprep.subr.mxu0 0.0
  %620 = vmatpush1.msra.mxu0 0.0
  %621 = vmatprep.subr.mxu0 0.0
  %622 = vmatpush1.msra.mxu0 0.0
  %623 = vmatprep.subr.mxu0 0.0
  %624 = vmatpush1.msra.mxu0 0.0
  %625 = vmatprep.subr.mxu0 0.0
  %626 = vmatpush1.msra.mxu0 0.0
  %627 = vmatprep.subr.mxu0 0.0
  %628 = vmatpush1.msra.mxu0 0.0
  %629 = vmatprep.subr.mxu0 0.0
  %630 = vmatpush1.msra.mxu0 0.0
  %631 = vmatprep.subr.mxu0 0.0
  %632 = vmatpush1.msra.mxu0 0.0
  %633 = vmatprep.subr.mxu0 0.0
  %634 = vmatpush1.msra.mxu0 0.0
  %635 = vmatprep.subr.mxu0 0.0
  %636 = vmatpush1.msra.mxu0 0.0
  %637 = vmatprep.subr.mxu0 0.0
  %638 = vmatpush1.msra.mxu0 0.0
  %639 = vmatprep.subr.mxu0 0.0
  %640 = vmatpush1.msra.mxu0 0.0
  %641 = vmatprep.subr.mxu0 0.0
  %642 = vmatpush1.msra.mxu0 0.0
  %643 = vmatprep.subr.mxu0 0.0
  %644 = vmatpush1.msra.mxu0 0.0
  %645 = vmatprep.subr.mxu0 0.0
  %646 = vmatpush1.msra.mxu0 %v617
  %647 = vmatprep.subr.mxu0 0.0
  %648 = vmatpush1.msra.mxu0 %v574
  %649 = vmatprep.subr.mxu0 0.0
  %650 = vmatpush1.msra.mxu0 %v573
  %651 = vmatprep.subr.mxu0 0.0
  %652 = vmatpush2.msra.mxu0 0.0
  %653 = vmatprep.subr.mxu0 0.0
  %654 = vmatpush2.msra.mxu0 0.0
  %655 = vmatprep.subr.mxu0 0.0
  %656 = vmatpush2.msra.mxu0 0.0
  %657 = vmatprep.subr.mxu0 0.0
  %658 = vmatpush2.msra.mxu0 0.0
  %659 = vmatprep.subr.mxu0 0.0
  %660 = vmatpush2.msra.mxu0 0.0
  %661 = vmatprep.subr.mxu0 0.0
  %662 = vmatpush2.msra.mxu0 0.0
  %663 = vmatprep.subr.mxu0 0.0
  %664 = vmatpush2.msra.mxu0 0.0
  %665 = vmatprep.subr.mxu0 0.0
  %666 = vmatpush2.msra.mxu0 0.0
  %667 = vmatprep.subr.mxu0 0.0
  %668 = vmatpush2.msra.mxu0 0.0
  %669 = vmatprep.subr.mxu0 0.0
  %670 = vmatpush2.msra.mxu0 0.0
  %671 = vmatprep.subr.mxu0 0.0
  %672 = vmatpush2.msra.mxu0 0.0
  %673 = vmatprep.subr.mxu0 0.0
  %674 = vmatpush2.msra.mxu0 0.0
  %675 = vmatprep.subr.mxu0 0.0
  %676 = vmatpush2.msra.mxu0 0.0
  %677 = vmatprep.subr.mxu0 0.0
  %678 = vmatpush2.msra.mxu0 0.0
  %679 = vmatprep.subr.mxu0 0.0
  %680 = vmatpush2.msra.mxu0 0.0
  %681 = vmatprep.subr.mxu0 0.0
  %682 = vmatpush2.msra.mxu0 0.0
  %683 = vmatprep.mubr.f32.mxu0 0.0
  %684 = vmatmul.mubr.f32.gmra.mxu0 %v605
  %v685 = vpop.f32.mrf.mxu0
  %v686 = vadd.f32 %v587, %v685
  %v687 = vpop.f32.mrf.mxu0
  %688 = vmatprep.mubr.f32.mxu0 0.0
  %689 = vmatmul.mubr.f32.gmra.mxu0 %v608
  %v690 = vpop.f32.mrf.mxu0
  %v691 = vadd.f32 %v592, %v690
  %v692 = vpop.f32.mrf.mxu0
  %693 = vmatprep.mubr.f32.mxu0 0.0
  %694 = vmatmul.mubr.f32.gmra.mxu0 %v611
  %v695 = vpop.f32.mrf.mxu0
  %v696 = vadd.f32 %v597, %v695
  %v697 = vpop.f32.mrf.mxu0
  %698 = vmatprep.mubr.f32.mxu0 0.0
  %699 = vmatmul.mubr.f32.gmra.mxu0 %v614
  %v700 = vpop.f32.mrf.mxu0
  %v701 = vadd.f32 %v602, %v700
  %v702 = vpop.f32.mrf.mxu0
  %703 = vdwg.mxu0
  %v704 = vtanh.pop %v686
  %v705 = vtanh.pop %v691
  %v706 = vtanh.pop %v696
  %v707 = vtanh.pop %v701
  %v708 = vld [vmem:[%s11] sm:$0xff]
  %v709 = vld [vmem:[%s11 + $0x8] sm:$0xff]
  %v710 = vld [vmem:[%s11 + $0x10] sm:$0x3]
  %v711 = vld [vmem:[%s12] sm:$0xff]
  %v712 = vld [vmem:[%s12 + $0x8] sm:$0xff]
  %v713 = vld [vmem:[%s12 + $0x10] sm:$0x3]
  %715 = vset.pattern.permute.xlu0 0
  %716 = vperm.xlu0 %715, %v711
  %v717 = vpop.permute.xlu0 %716
  %720 = vset.pattern.permute.xlu0 0
  %721 = vperm.xlu0 %720, %v712
  %v722 = vpop.permute.xlu0 %721
  %725 = vset.pattern.permute.xlu0 0
  %726 = vperm.xlu0 %725, %v713
  %v727 = vpop.permute.xlu0 %726
  %v730 = vsel %vm259, %v708, 0
  %v733 = vsel %vm259, %v709, 0
  %v736 = vsel %vm259, %v710, 0
  %v739 = vsel %vm269, %v707, 0
  %741 = vmatprep.subr.mxu0 0.0
  %742 = vmatpush1.msra.mxu0 0.0
  %743 = vmatprep.subr.mxu0 0.0
  %744 = vmatpush1.msra.mxu0 0.0
  %745 = vmatprep.subr.mxu0 0.0
  %746 = vmatpush1.msra.mxu0 0.0
  %747 = vmatprep.subr.mxu0 0.0
  %748 = vmatpush1.msra.mxu0 0.0
  %749 = vmatprep.subr.mxu0 0.0
  %750 = vmatpush1.msra.mxu0 0.0
  %751 = vmatprep.subr.mxu0 0.0
  %752 = vmatpush1.msra.mxu0 0.0
  %753 = vmatprep.subr.mxu0 0.0
  %754 = vmatpush1.msra.mxu0 0.0
  %755 = vmatprep.subr.mxu0 0.0
  %756 = vmatpush1.msra.mxu0 0.0
  %757 = vmatprep.subr.mxu0 0.0
  %758 = vmatpush1.msra.mxu0 0.0
  %759 = vmatprep.subr.mxu0 0.0
  %760 = vmatpush1.msra.mxu0 0.0
  %761 = vmatprep.subr.mxu0 0.0
  %762 = vmatpush1.msra.mxu0 0.0
  %763 = vmatprep.subr.mxu0 0.0
  %764 = vmatpush1.msra.mxu0 0.0
  %765 = vmatprep.subr.mxu0 0.0
  %766 = vmatpush1.msra.mxu0 %v739
  %767 = vmatprep.subr.mxu0 0.0
  %768 = vmatpush1.msra.mxu0 %v706
  %769 = vmatprep.subr.mxu0 0.0
  %770 = vmatpush1.msra.mxu0 %v705
  %771 = vmatprep.subr.mxu0 0.0
  %772 = vmatpush1.msra.mxu0 %v704
  %773 = vmatprep.subr.mxu0 0.0
  %774 = vmatpush2.msra.mxu0 0.0
  %775 = vmatprep.subr.mxu0 0.0
  %776 = vmatpush2.msra.mxu0 0.0
  %777 = vmatprep.subr.mxu0 0.0
  %778 = vmatpush2.msra.mxu0 0.0
  %779 = vmatprep.subr.mxu0 0.0
  %780 = vmatpush2.msra.mxu0 0.0
  %781 = vmatprep.subr.mxu0 0.0
  %782 = vmatpush2.msra.mxu0 0.0
  %783 = vmatprep.subr.mxu0 0.0
  %784 = vmatpush2.msra.mxu0 0.0
  %785 = vmatprep.subr.mxu0 0.0
  %786 = vmatpush2.msra.mxu0 0.0
  %787 = vmatprep.subr.mxu0 0.0
  %788 = vmatpush2.msra.mxu0 0.0
  %789 = vmatprep.subr.mxu0 0.0
  %790 = vmatpush2.msra.mxu0 0.0
  %791 = vmatprep.subr.mxu0 0.0
  %792 = vmatpush2.msra.mxu0 0.0
  %793 = vmatprep.subr.mxu0 0.0
  %794 = vmatpush2.msra.mxu0 0.0
  %795 = vmatprep.subr.mxu0 0.0
  %796 = vmatpush2.msra.mxu0 0.0
  %797 = vmatprep.subr.mxu0 0.0
  %798 = vmatpush2.msra.mxu0 0.0
  %799 = vmatprep.subr.mxu0 0.0
  %800 = vmatpush2.msra.mxu0 0.0
  %801 = vmatprep.subr.mxu0 0.0
  %802 = vmatpush2.msra.mxu0 0.0
  %803 = vmatprep.subr.mxu0 0.0
  %804 = vmatpush2.msra.mxu0 0.0
  %805 = vmatprep.mubr.f32.mxu0 0.0
  %806 = vmatmul.mubr.f32.gmra.mxu0 %v730
  %v807 = vpop.f32.mrf.mxu0
  %v808 = vadd.f32 %v717, %v807
  %v809 = vpop.f32.mrf.mxu0
  %810 = vmatprep.mubr.f32.mxu0 0.0
  %811 = vmatmul.mubr.f32.gmra.mxu0 %v733
  %v812 = vpop.f32.mrf.mxu0
  %v813 = vadd.f32 %v722, %v812
  %v814 = vpop.f32.mrf.mxu0
  %815 = vmatprep.mubr.f32.mxu0 0.0
  %816 = vmatmul.mubr.f32.gmra.mxu0 %v736
  %v817 = vpop.f32.mrf.mxu0
  %v818 = vadd.f32 %v727, %v817
  %v819 = vpop.f32.mrf.mxu0
  %820 = vdwg.mxu0
  %v821 = vmul.f32 %v808, 0.5
  %v822 = vmul.f32 %v813, 0.5
  %v823 = vmul.f32 %v818, 0.5
  %v824 = vtanh.pop %v821
  %v825 = vtanh.pop %v822
  %v826 = vtanh.pop %v823
  %v827 = vadd.f32 %v824, 1.0
  %v828 = vadd.f32 %v825, 1.0
  %v829 = vadd.f32 %v826, 1.0
  %v830 = vmul.f32 %v827, 0.5
  %v831 = vmul.f32 %v828, 0.5
  %v832 = vmul.f32 %v829, 0.5
  %833 = vxpose.xlu0.b32.start [1/16] %v830, 128
  %834 = vxpose.xlu0.b32.cont [2/16] %v831, 128
  %835 = vxpose.xlu0.b32.cont [3/16] %v832, 128
  %836 = vxpose.xlu0.b32.cont [4/16] 0.0, 128
  %837 = vxpose.xlu0.b32.cont [5/16] 0.0, 128
  %838 = vxpose.xlu0.b32.cont [6/16] 0.0, 128
  %839 = vxpose.xlu0.b32.cont [7/16] 0.0, 128
  %840 = vxpose.xlu0.b32.cont [8/16] 0.0, 128
  %841 = vxpose.xlu0.b32.cont [9/16] 0.0, 128
  %842 = vxpose.xlu0.b32.cont [10/16] 0.0, 128
  %843 = vxpose.xlu0.b32.cont [11/16] 0.0, 128
  %844 = vxpose.xlu0.b32.cont [12/16] 0.0, 128
  %845 = vxpose.xlu0.b32.cont [13/16] 0.0, 128
  %846 = vxpose.xlu0.b32.cont [14/16] 0.0, 128
  %847 = vxpose.xlu0.b32.cont [15/16] 0.0, 128
  %848 = vxpose.xlu0.b32.end [16/16] 0.0, 128
  %v849 = vpop.trf.xlu0
  %v850 = vpop.trf.xlu0
  %v851 = vpop.trf.xlu0
  %v852 = vpop.trf.xlu0
  %v853 = vpop.trf.xlu0
  %v854 = vpop.trf.xlu0
  %v855 = vpop.trf.xlu0
  %v856 = vpop.trf.xlu0
  %v857 = vpop.trf.xlu0
  %v858 = vpop.trf.xlu0
  %v859 = vpop.trf.xlu0
  %v860 = vpop.trf.xlu0
  %v861 = vpop.trf.xlu0
  %v862 = vpop.trf.xlu0
  %v863 = vpop.trf.xlu0
  %v864 = vpop.trf.xlu0
  %vm865 = vcmask 146432
  %866 = vst.msk [vmem:[%s13] sm:$0xff] %vm865, %v849
  %867 = vst.msk [vmem:[%s13 + $0x8] sm:$0xff] %vm865, %v850
  %868 = vst.msk [vmem:[%s13 + $0x10] sm:$0xff] %vm865, %v851
  %869 = vst.msk [vmem:[%s13 + $0x18] sm:$0xff] %vm865, %v852
  %870 = vst.msk [vmem:[%s13 + $0x20] sm:$0xff] %vm865, %v853
  %871 = vst.msk [vmem:[%s13 + $0x28] sm:$0xff] %vm865, %v854
  %872 = vst.msk [vmem:[%s13 + $0x30] sm:$0xff] %vm865, %v855
  %873 = vst.msk [vmem:[%s13 + $0x38] sm:$0xff] %vm865, %v856
  %874 = vst.msk [vmem:[%s13 + $0x40] sm:$0xff] %vm865, %v857
  %875 = vst.msk [vmem:[%s13 + $0x48] sm:$0xff] %vm865, %v858
  %876 = vst.msk [vmem:[%s13 + $0x50] sm:$0xff] %vm865, %v859
  %877 = vst.msk [vmem:[%s13 + $0x58] sm:$0xff] %vm865, %v860
  %878 = vst.msk [vmem:[%s13 + $0x60] sm:$0xff] %vm865, %v861
  %879 = vst.msk [vmem:[%s13 + $0x68] sm:$0xff] %vm865, %v862
  %880 = vst.msk [vmem:[%s13 + $0x70] sm:$0xff] %vm865, %v863
  %881 = vst.msk [vmem:[%s13 + $0x78] sm:$0xff] %vm865, %v864
  // Predicated region
  $region54: #{tpu_custom_call.1} parent=0 // pred_check
    _
  $region55: #{tpu_custom_call.1} parent=0 // pred_check_branch
    %883 = sbr.rel (0) target = $region57
  $region56: #{tpu_custom_call.1} parent=0 // pred_region
    _
  $region57: #{tpu_custom_call.1} parent=0 // pred_fallthru
    _
  // Predicated region
  $region58: #{tpu_custom_call.1} parent=0 // pred_check
    _
  $region59: #{tpu_custom_call.1} parent=0 // pred_check_branch
    %885 = sbr.rel (0) target = $region61
  $region60: #{tpu_custom_call.1} parent=0 // pred_region
    _
  $region61: #{tpu_custom_call.1} parent=0 // pred_fallthru
    _

</llo_original>
